<compile_context>
chip_gen: v5e
topology: v5e:2x2
jax: 0.10.0
libtpu: 0.0.40
codegen_flags: <defaults>
</compile_context>

<pallas_src>
import functools

import numpy as np
import jax
import jax.numpy as jnp
from jax.experimental import pallas as pl
from jax.experimental.pallas import tpu as pltpu

SQRT2 = float(np.sqrt(2.0))
LRELU_SLOPE = 0.2
H = W = 4            # SynthesisLayer resolution = 4 (fixed by the module)
HW = H * W


# --------------------------------------------------------------------------
# Fused Pallas kernel: fc -> +skip -> modulated 3x3 conv (demod, noise, lrelu)
#                      -> 1x1 toRGB (+bias).  Everything 2-D, VMEM resident,
#                      zero in-kernel reshapes / transposes / relayouts.
# --------------------------------------------------------------------------
def _foreword_kernel(z_ref, mod0_ref, mod1_ref, feat_ref, noise_ref,
                     wfc_ref, bfc_ref, waff0_ref, baff0_ref, ssq_ref, bconv_ref,
                     waff1_ref, baff1_ref, brgb_mat_ref, brgb_b_ref, expand_ref,
                     x_out_ref, img_out_ref):
    f32 = jnp.float32
    expand = expand_ref[...]                                   # (C, C*HW) lane expander

    # ---- fc (FullyConnectedLayer, lrelu); weight gain pre-folded into wfc ----
    fc = jnp.dot(z_ref[...], wfc_ref[...], preferred_element_type=f32) + bfc_ref[...]
    fc = jnp.where(fc >= 0.0, fc, fc * LRELU_SLOPE) * SQRT2
    x0 = fc + feat_ref[...]                                    # (N, C*HW), NCHW-flat

    # ---- SynthesisLayer style affine (single dot; gains pre-folded) ----
    styles0 = (jnp.dot(mod0_ref[...], waff0_ref[...], preferred_element_type=f32)
               + baff0_ref[...])                               # (N, C)
    # demod coefficients: rsqrt( sum_c styles^2 * sum_k W^2 + 1e-8 )
    dcoefs = jax.lax.rsqrt(
        jnp.dot(styles0 * styles0, ssq_ref[...], preferred_element_type=f32) + 1e-8)

    # ---- modulate -> 3x3 conv as one dense MXU matmul -> demod -> noise -> lrelu ----
    xm = x0 * jnp.dot(styles0, expand, preferred_element_type=f32)
    y = jnp.dot(xm, bconv_ref[...], preferred_element_type=f32)     # (N, C*HW)
    y = y * jnp.dot(dcoefs, expand, preferred_element_type=f32)
    y = y + noise_ref[...]                                     # noise * strength pre-folded
    y = jnp.where(y >= 0.0, y, y * LRELU_SLOPE) * SQRT2        # act_gain=sqrt(2); clamp=None
    x_out_ref[...] = y.astype(x_out_ref.dtype)
    # NOTE: this SynthesisLayer.forward variant never applies self.bias -> omitted.

    # ---- ToRGBLayer: 1x1 modulated conv (no demod) + bias; lane-padded output ----
    styles1 = (jnp.dot(mod1_ref[...], waff1_ref[...], preferred_element_type=f32)
               + baff1_ref[...])                               # gains pre-folded
    xm1 = y * jnp.dot(styles1, expand, preferred_element_type=f32)
    img = jnp.dot(xm1, brgb_mat_ref[...], preferred_element_type=f32)
    img_out_ref[...] = (img + brgb_b_ref[...]).astype(img_out_ref.dtype)


# --------------------------------------------------------------------------
# Host-side constant: which padded input pixel feeds which output pixel per tap.
# T[ky, kx, q, p] = 1 iff input pixel q == output pixel p shifted by (ky-1, kx-1)
# and inside the h x w grid (zero padding otherwise).
# --------------------------------------------------------------------------
def _make_shift_tensor(h, w):
    hw = h * w
    t = np.zeros((3, 3, hw, hw), np.float32)
    for ky in range(3):
        for kx in range(3):
            for ph in range(h):
                for pw in range(w):
                    qh, qw = ph + ky - 1, pw + kx - 1
                    if 0 <= qh < h and 0 <= qw < w:
                        t[ky, kx, qh * w + qw, ph * w + pw] = 1.0
    return t


# --------------------------------------------------------------------------
# One-time weight preprocessing (off the hot path; call once per param set).
# --------------------------------------------------------------------------
def prepare_params(params, batch_size):
    f32 = jnp.float32
    conv_w = params["conv_w"].astype(f32)                      # (C, C, 3, 3)
    C = conv_w.shape[0]
    CHW = C * HW
    z_dim = params["fc_w"].shape[1]
    w_dim = params["conv_affine_w"].shape[1]
    rgb_w = params["torgb_w"][:, :, 0, 0].astype(f32)          # (img_ch, C)
    img_ch = rgb_w.shape[0]
    img_hw = img_ch * HW
    img_pad = max(128, -(-img_hw // 128) * 128)                # lane-dense store width

    aff_gain = 1.0 / np.sqrt(w_dim)
    torgb_gain = 1.0 / np.sqrt(C)

    # 3x3 conv folded into one dense (C*HW, C*HW) matrix; 1x1 ToRGB likewise.
    shift = jnp.asarray(_make_shift_tensor(H, W))              # (3,3,HW,HW) constant
    bconv_mat = jnp.einsum("ocyx,yxqp->cqop", conv_w, shift).reshape(CHW, CHW)
    brgb_mat = jnp.einsum("oc,qp->cqop", rgb_w,
                          jnp.eye(HW, dtype=f32)).reshape(CHW, img_hw)
    brgb_mat = jnp.pad(brgb_mat, ((0, 0), (0, img_pad - img_hw)))
    brgb_b = jnp.pad(jnp.repeat(params["torgb_b"].astype(f32), HW),
                     (0, img_pad - img_hw)).reshape(1, img_pad)

    # Lane-expansion matrix E[c, c*HW + p] = 1: broadcasts per-channel vectors onto
    # the NCHW-flat lane layout via a tiny MXU dot (no in-kernel relayouts).
    expand = jnp.asarray(
        (np.arange(C)[:, None] == (np.arange(CHW)[None, :] // HW)).astype(np.float32))

    # noise_mode='random' draws fresh randn each call in the reference; here the draw
    # is a fixed buffer, pre-scaled by noise_strength (0 at init).
    # TODO(synk): regenerate/replace prepped["noise"] per call if fresh noise is needed.
    noise_scaled = (jnp.tile(params["noise"].astype(f32).reshape(batch_size, HW), (1, C))
                    * params["noise_strength"].astype(f32))

    return dict(
        wfc=params["fc_w"].astype(f32).T * (1.0 / np.sqrt(z_dim)),   # (z_dim, CHW)
        bfc=params["fc_b"].astype(f32).reshape(1, CHW),
        waff0=params["conv_affine_w"].astype(f32).T * aff_gain,      # (w_dim, C)
        baff0=params["conv_affine_b"].astype(f32).reshape(1, C),
        ssq=jnp.sum(conv_w * conv_w, axis=(2, 3)).T,                 # (Cin, Cout)
        bconv=bconv_mat,                                             # (CHW, CHW)
        waff1=params["torgb_affine_w"].astype(f32).T * (aff_gain * torgb_gain),
        baff1=params["torgb_affine_b"].astype(f32).reshape(1, C) * torgb_gain,
        brgb_mat=brgb_mat,                                           # (CHW, img_pad)
        brgb_b=brgb_b,                                               # (1, img_pad)
        expand=expand,                                               # (C, CHW)
        noise=noise_scaled,                                          # (N, CHW)
    )


# --------------------------------------------------------------------------
# Hot-path forward: trivial activation concat/reshape + one pallas_call.
# --------------------------------------------------------------------------
def synthesis_foreword_forward(prepped, x, ws, feats, img=None, force_fp32=False,
                               *, img_channels):
    del img, force_fp32                       # img is replaced (architecture='skip')
    f32 = jnp.float32
    z = x.astype(f32)
    N, z_dim = z.shape
    C = z_dim // 2                            # in_channels
    CHW = C * HW
    img_hw = img_channels * HW
    img_pad = prepped["brgb_mat"].shape[1]

    # mod vectors = concat([ws[:, k], x_global]) — single (N, w_dim) affine inputs.
    mod0 = jnp.concatenate([ws[:, 0].astype(f32), z], axis=1)
    mod1 = jnp.concatenate([ws[:, 1].astype(f32), z], axis=1)
    feat_flat = feats[4].astype(f32).reshape(N, CHW)           # NCHW-flat

    vmem = pl.BlockSpec(memory_space=pltpu.MemorySpace.VMEM)

    x_out, img_out = pl.pallas_call(
        _foreword_kernel,
        out_shape=(jax.ShapeDtypeStruct((N, CHW), f32),
                   jax.ShapeDtypeStruct((N, img_pad), f32)),
        in_specs=[vmem] * 16,
        out_specs=(vmem, vmem),
    )(z, mod0, mod1, feat_flat, prepped["noise"],
      prepped["wfc"], prepped["bfc"], prepped["waff0"], prepped["baff0"],
      prepped["ssq"], prepped["bconv"], prepped["waff1"], prepped["baff1"],
      prepped["brgb_mat"], prepped["brgb_b"], prepped["expand"])

    # NCHW-flat -> NCHW (metadata-only reshapes; img drops the lane padding).
    return (x_out.reshape(N, C, H, W),
            img_out[:, :img_hw].reshape(N, img_channels, H, W))


# --------------------------------------------------------------------------
# Plain-JAX reference (mirrors the PyTorch forward), used for a self-check.
# --------------------------------------------------------------------------
def _reference_forward(params, x, ws, feat4):
    f32 = jnp.float32
    z = x.astype(f32)
    N, zd = z.shape
    C = zd // 2
    wdim = params["conv_affine_w"].shape[1]

    h = z @ (params["fc_w"].astype(f32) * (1.0 / np.sqrt(zd))).T + params["fc_b"][None]
    h = jnp.where(h >= 0, h, LRELU_SLOPE * h) * SQRT2
    xc = h.reshape(N, C, 4, 4) + feat4.astype(f32)

    mod0 = jnp.concatenate([ws[:, 0].astype(f32), z], axis=1)
    s0 = mod0 @ (params["conv_affine_w"].astype(f32) * (1.0 / np.sqrt(wdim))).T \
        + params["conv_affine_b"][None]
    wc = params["conv_w"].astype(f32)
    wmod = wc[None] * s0[:, None, :, None, None]
    d = jax.lax.rsqrt(jnp.sum(wmod ** 2, axis=(2, 3, 4)) + 1e-8)
    wmod = wmod * d[:, :, None, None, None]
    xpad = jnp.pad(xc, ((0, 0), (0, 0), (1, 1), (1, 1)))
    y = jnp.zeros((N, C, 4, 4), f32)
    for ky in range(3):
        for kx in range(3):
            y = y + jnp.einsum("noi,nihw->nohw", wmod[:, :, :, ky, kx],
                               xpad[:, :, ky:ky + 4, kx:kx + 4])
    y = y + params["noise"].astype(f32) * params["noise_strength"]
    y = jnp.where(y >= 0, y, LRELU_SLOPE * y) * SQRT2

    mod1 = jnp.concatenate([ws[:, 1].astype(f32), z], axis=1)
    s1 = (mod1 @ (params["torgb_affine_w"].astype(f32) * (1.0 / np.sqrt(wdim))).T
          + params["torgb_affine_b"][None]) * (1.0 / np.sqrt(C))
    wr = params["torgb_w"][:, :, 0, 0].astype(f32)
    img = jnp.einsum("noi,nihw->nohw", wr[None] * s1[:, None, :], y) \
        + params["torgb_b"][None, :, None, None]
    return y, img


# --------------------------------------------------------------------------
# Main
# --------------------------------------------------------------------------
if __name__ == "__main__":
    N = 2
    z_dim = 32
    C = z_dim // 2            # in_channels = 16
    img_channels = 4
    w_dim = z_dim // 2 * 3    # = 48

    key = jax.random.PRNGKey(0)
    ks = jax.random.split(key, 9)

    # Parameters matching the torch inits (randn weights, bias_init as in module).
    params = {
        "fc_w": jax.random.normal(ks[0], (C * H * W, z_dim), jnp.float32),
        "fc_b": jnp.zeros((C * H * W,), jnp.float32),
        "conv_affine_w": jax.random.normal(ks[1], (C, w_dim), jnp.float32),
        "conv_affine_b": jnp.ones((C,), jnp.float32),        # bias_init=1
        "conv_w": jax.random.normal(ks[2], (C, C, 3, 3), jnp.float32),
        "noise_strength": jnp.zeros((), jnp.float32),        # init 0
        "noise": jax.random.normal(ks[3], (N, 1, H, W), jnp.float32),
        "torgb_affine_w": jax.random.normal(ks[4], (C, w_dim), jnp.float32),
        "torgb_affine_b": jnp.ones((C,), jnp.float32),       # bias_init=1
        "torgb_w": jax.random.normal(ks[5], (img_channels, C, 1, 1), jnp.float32),
        "torgb_b": jnp.zeros((img_channels,), jnp.float32),
    }

    x = jax.random.normal(ks[6], (N, z_dim), jnp.float32)
    ws = jax.random.normal(ks[7], (N, 2, z_dim // 2), jnp.float32)
    feats = {4: jax.random.normal(ks[8], (N, C, H, W), jnp.float32)}

    # One-time weight preprocessing (outside the jitted hot path).
    prepped = prepare_params(params, N)
    prepped = jax.tree_util.tree_map(jnp.asarray, prepped)

    fwd = jax.jit(functools.partial(synthesis_foreword_forward,
                                    img_channels=img_channels))
    x_out, img_out = fwd(prepped, x, ws, feats)
    jax.block_until_ready((x_out, img_out))

    assert x_out.shape == (N, C, H, W), x_out.shape
    assert img_out.shape == (N, img_channels, H, W), img_out.shape
    assert x_out.dtype == jnp.float32 and img_out.dtype == jnp.float32

    x_ref, img_ref = _reference_forward(params, x, ws, feats[4])
    np.testing.assert_allclose(np.asarray(x_out), np.asarray(x_ref), rtol=1e-3, atol=1e-3)
    np.testing.assert_allclose(np.asarray(img_out), np.asarray(img_ref), rtol=1e-3, atol=1e-3)

    print("KERNEL_OK")
</pallas_src>

<mosaic_0001>
module attributes {stable_mosaic.version = 11 : i64} {
  func.func @_foreword_kernel(%arg0: memref<2x32xf32, #tpu.memory_space<vmem>>, %arg1: memref<2x48xf32, #tpu.memory_space<vmem>>, %arg2: memref<2x48xf32, #tpu.memory_space<vmem>>, %arg3: memref<2x256xf32, #tpu.memory_space<vmem>>, %arg4: memref<2x256xf32, #tpu.memory_space<vmem>>, %arg5: memref<32x256xf32, #tpu.memory_space<vmem>>, %arg6: memref<1x256xf32, #tpu.memory_space<vmem>>, %arg7: memref<48x16xf32, #tpu.memory_space<vmem>>, %arg8: memref<1x16xf32, #tpu.memory_space<vmem>>, %arg9: memref<16x16xf32, #tpu.memory_space<vmem>>, %arg10: memref<256x256xf32, #tpu.memory_space<vmem>>, %arg11: memref<48x16xf32, #tpu.memory_space<vmem>>, %arg12: memref<1x16xf32, #tpu.memory_space<vmem>>, %arg13: memref<256x128xf32, #tpu.memory_space<vmem>>, %arg14: memref<1x128xf32, #tpu.memory_space<vmem>>, %arg15: memref<16x256xf32, #tpu.memory_space<vmem>>, %arg16: memref<2x256xf32, #tpu.memory_space<vmem>>, %arg17: memref<2x128xf32, #tpu.memory_space<vmem>>) attributes {dimension_semantics = [], scalar_prefetch = 0 : i64, scratch_operands = 0 : i64, tpu.core_type = #tpu.core_type<tc>} {
    %c0 = arith.constant 0 : index
    %c0_0 = arith.constant 0 : index
    %0 = vector.load %arg15[%c0, %c0_0] : memref<16x256xf32, #tpu.memory_space<vmem>>, vector<16x256xf32>
    %c0_1 = arith.constant 0 : index
    %c0_2 = arith.constant 0 : index
    %1 = vector.load %arg0[%c0_1, %c0_2] : memref<2x32xf32, #tpu.memory_space<vmem>>, vector<2x32xf32>
    %c0_3 = arith.constant 0 : index
    %c0_4 = arith.constant 0 : index
    %2 = vector.load %arg5[%c0_3, %c0_4] : memref<32x256xf32, #tpu.memory_space<vmem>>, vector<32x256xf32>
    %cst = arith.constant dense<0.000000e+00> : vector<2x256xf32>
    %3 = tpu.matmul %1, %2, %cst {dimension_numbers = #tpu.dot_dimension_numbers<[1], [0], [0], [1], [0, 0, 1, 1], [], []>} : vector<2x32xf32>, vector<32x256xf32>, vector<2x256xf32> -> vector<2x256xf32>
    %c0_5 = arith.constant 0 : index
    %c0_6 = arith.constant 0 : index
    %4 = vector.load %arg6[%c0_5, %c0_6] : memref<1x256xf32, #tpu.memory_space<vmem>>, vector<1x256xf32>
    %5 = vector.broadcast %4 : vector<1x256xf32> to vector<2x256xf32>
    %6 = arith.addf %3, %5 : vector<2x256xf32>
    %cst_7 = arith.constant 0.000000e+00 : f32
    %7 = vector.broadcast %cst_7 : f32 to vector<2x256xf32>
    %8 = arith.cmpf oge, %6, %7 : vector<2x256xf32>
    %cst_8 = arith.constant 2.000000e-01 : f32
    %9 = vector.broadcast %cst_8 : f32 to vector<2x256xf32>
    %10 = arith.mulf %6, %9 : vector<2x256xf32>
    %11 = arith.select %8, %6, %10 : vector<2x256xi1>, vector<2x256xf32>
    %cst_9 = arith.constant 1.41421354 : f32
    %12 = vector.broadcast %cst_9 : f32 to vector<2x256xf32>
    %13 = arith.mulf %11, %12 : vector<2x256xf32>
    %c0_10 = arith.constant 0 : index
    %c0_11 = arith.constant 0 : index
    %14 = vector.load %arg3[%c0_10, %c0_11] : memref<2x256xf32, #tpu.memory_space<vmem>>, vector<2x256xf32>
    %15 = arith.addf %13, %14 : vector<2x256xf32>
    %c0_12 = arith.constant 0 : index
    %c0_13 = arith.constant 0 : index
    %16 = vector.load %arg1[%c0_12, %c0_13] : memref<2x48xf32, #tpu.memory_space<vmem>>, vector<2x48xf32>
    %c0_14 = arith.constant 0 : index
    %c0_15 = arith.constant 0 : index
    %17 = vector.load %arg7[%c0_14, %c0_15] : memref<48x16xf32, #tpu.memory_space<vmem>>, vector<48x16xf32>
    %cst_16 = arith.constant dense<0.000000e+00> : vector<2x16xf32>
    %18 = tpu.matmul %16, %17, %cst_16 {dimension_numbers = #tpu.dot_dimension_numbers<[1], [0], [0], [1], [0, 0, 1, 1], [], []>} : vector<2x48xf32>, vector<48x16xf32>, vector<2x16xf32> -> vector<2x16xf32>
    %c0_17 = arith.constant 0 : index
    %c0_18 = arith.constant 0 : index
    %19 = vector.load %arg8[%c0_17, %c0_18] : memref<1x16xf32, #tpu.memory_space<vmem>>, vector<1x16xf32>
    %20 = vector.broadcast %19 : vector<1x16xf32> to vector<2x16xf32>
    %21 = arith.addf %18, %20 : vector<2x16xf32>
    %22 = arith.mulf %21, %21 : vector<2x16xf32>
    %c0_19 = arith.constant 0 : index
    %c0_20 = arith.constant 0 : index
    %23 = vector.load %arg9[%c0_19, %c0_20] : memref<16x16xf32, #tpu.memory_space<vmem>>, vector<16x16xf32>
    %cst_21 = arith.constant dense<0.000000e+00> : vector<2x16xf32>
    %24 = tpu.matmul %22, %23, %cst_21 {dimension_numbers = #tpu.dot_dimension_numbers<[1], [0], [0], [1], [0, 0, 1, 1], [], []>} : vector<2x16xf32>, vector<16x16xf32>, vector<2x16xf32> -> vector<2x16xf32>
    %cst_22 = arith.constant 9.99999993E-9 : f32
    %25 = vector.broadcast %cst_22 : f32 to vector<2x16xf32>
    %26 = arith.addf %24, %25 : vector<2x16xf32>
    %27 = math.rsqrt %26 : vector<2x16xf32>
    %cst_23 = arith.constant dense<0.000000e+00> : vector<2x256xf32>
    %28 = tpu.matmul %21, %0, %cst_23 {dimension_numbers = #tpu.dot_dimension_numbers<[1], [0], [0], [1], [0, 0, 1, 1], [], []>} : vector<2x16xf32>, vector<16x256xf32>, vector<2x256xf32> -> vector<2x256xf32>
    %29 = arith.mulf %15, %28 : vector<2x256xf32>
    %c0_24 = arith.constant 0 : index
    %c0_25 = arith.constant 0 : index
    %30 = vector.load %arg10[%c0_24, %c0_25] : memref<256x256xf32, #tpu.memory_space<vmem>>, vector<256x256xf32>
    %cst_26 = arith.constant dense<0.000000e+00> : vector<2x256xf32>
    %31 = tpu.matmul %29, %30, %cst_26 {dimension_numbers = #tpu.dot_dimension_numbers<[1], [0], [0], [1], [0, 0, 1, 1], [], []>} : vector<2x256xf32>, vector<256x256xf32>, vector<2x256xf32> -> vector<2x256xf32>
    %cst_27 = arith.constant dense<0.000000e+00> : vector<2x256xf32>
    %32 = tpu.matmul %27, %0, %cst_27 {dimension_numbers = #tpu.dot_dimension_numbers<[1], [0], [0], [1], [0, 0, 1, 1], [], []>} : vector<2x16xf32>, vector<16x256xf32>, vector<2x256xf32> -> vector<2x256xf32>
    %33 = arith.mulf %31, %32 : vector<2x256xf32>
    %c0_28 = arith.constant 0 : index
    %c0_29 = arith.constant 0 : index
    %34 = vector.load %arg4[%c0_28, %c0_29] : memref<2x256xf32, #tpu.memory_space<vmem>>, vector<2x256xf32>
    %35 = arith.addf %33, %34 : vector<2x256xf32>
    %cst_30 = arith.constant 0.000000e+00 : f32
    %36 = vector.broadcast %cst_30 : f32 to vector<2x256xf32>
    %37 = arith.cmpf oge, %35, %36 : vector<2x256xf32>
    %cst_31 = arith.constant 2.000000e-01 : f32
    %38 = vector.broadcast %cst_31 : f32 to vector<2x256xf32>
    %39 = arith.mulf %35, %38 : vector<2x256xf32>
    %40 = arith.select %37, %35, %39 : vector<2x256xi1>, vector<2x256xf32>
    %cst_32 = arith.constant 1.41421354 : f32
    %41 = vector.broadcast %cst_32 : f32 to vector<2x256xf32>
    %42 = arith.mulf %40, %41 : vector<2x256xf32>
    %c0_33 = arith.constant 0 : index
    %c0_34 = arith.constant 0 : index
    %43 = vector.load %arg16[%c0_33, %c0_34] : memref<2x256xf32, #tpu.memory_space<vmem>>, vector<2x256xf32>
    tpu.vector_store %arg16[%c0_33, %c0_34], %42 {strides = array<i32>} : memref<2x256xf32, #tpu.memory_space<vmem>>, vector<2x256xf32>,
    %c0_35 = arith.constant 0 : index
    %c0_36 = arith.constant 0 : index
    %44 = vector.load %arg2[%c0_35, %c0_36] : memref<2x48xf32, #tpu.memory_space<vmem>>, vector<2x48xf32>
    %c0_37 = arith.constant 0 : index
    %c0_38 = arith.constant 0 : index
    %45 = vector.load %arg11[%c0_37, %c0_38] : memref<48x16xf32, #tpu.memory_space<vmem>>, vector<48x16xf32>
    %cst_39 = arith.constant dense<0.000000e+00> : vector<2x16xf32>
    %46 = tpu.matmul %44, %45, %cst_39 {dimension_numbers = #tpu.dot_dimension_numbers<[1], [0], [0], [1], [0, 0, 1, 1], [], []>} : vector<2x48xf32>, vector<48x16xf32>, vector<2x16xf32> -> vector<2x16xf32>
    %c0_40 = arith.constant 0 : index
    %c0_41 = arith.constant 0 : index
    %47 = vector.load %arg12[%c0_40, %c0_41] : memref<1x16xf32, #tpu.memory_space<vmem>>, vector<1x16xf32>
    %48 = vector.broadcast %47 : vector<1x16xf32> to vector<2x16xf32>
    %49 = arith.addf %46, %48 : vector<2x16xf32>
    %cst_42 = arith.constant dense<0.000000e+00> : vector<2x256xf32>
    %50 = tpu.matmul %49, %0, %cst_42 {dimension_numbers = #tpu.dot_dimension_numbers<[1], [0], [0], [1], [0, 0, 1, 1], [], []>} : vector<2x16xf32>, vector<16x256xf32>, vector<2x256xf32> -> vector<2x256xf32>
    %51 = arith.mulf %42, %50 : vector<2x256xf32>
    %c0_43 = arith.constant 0 : index
    %c0_44 = arith.constant 0 : index
    %52 = vector.load %arg13[%c0_43, %c0_44] : memref<256x128xf32, #tpu.memory_space<vmem>>, vector<256x128xf32>
    %cst_45 = arith.constant dense<0.000000e+00> : vector<2x128xf32>
    %53 = tpu.matmul %51, %52, %cst_45 {dimension_numbers = #tpu.dot_dimension_numbers<[1], [0], [0], [1], [0, 0, 1, 1], [], []>} : vector<2x256xf32>, vector<256x128xf32>, vector<2x128xf32> -> vector<2x128xf32>
    %c0_46 = arith.constant 0 : index
    %c0_47 = arith.constant 0 : index
    %54 = vector.load %arg14[%c0_46, %c0_47] : memref<1x128xf32, #tpu.memory_space<vmem>>, vector<1x128xf32>
    %55 = vector.broadcast %54 : vector<1x128xf32> to vector<2x128xf32>
    %56 = arith.addf %53, %55 : vector<2x128xf32>
    %c0_48 = arith.constant 0 : index
    %c0_49 = arith.constant 0 : index
    %57 = vector.load %arg17[%c0_48, %c0_49] : memref<2x128xf32, #tpu.memory_space<vmem>>, vector<2x128xf32>
    tpu.vector_store %arg17[%c0_48, %c0_49], %56 {strides = array<i32>} : memref<2x128xf32, #tpu.memory_space<vmem>>, vector<2x128xf32>,
    return
  }
}

</mosaic_0001>

<llo_original>
// kernel: synthesis_foreword_forward.1
$region0: #{synthesis_foreword_forward.1}
  #allocation0 [shape = 'u32[]', space=smem, size = 0x4, offset = 0x4, fixed_abs, tag = 'smem constant byte address 0x4 - core index']
  #allocation1 [shape = 'u32[72,128]{1,0:T(1,128)}', space=vmem, size = 0x9000, scoped, tag = 'internal scratch']
  %s0 = inlined_call_operand.vmem [shape: f32[2,32], index: 0, kind: input, shape index: {}]
  %s1 = inlined_call_operand.vmem [shape: f32[2,48], index: 1, kind: input, shape index: {}]
  %s2 = inlined_call_operand.vmem [shape: f32[2,48], index: 2, kind: input, shape index: {}]
  %s3 = inlined_call_operand.vmem [shape: f32[2,256], index: 3, kind: input, shape index: {}]
  %s4 = inlined_call_operand.vmem [shape: f32[2,256], index: 4, kind: input, shape index: {}]
  %s5 = inlined_call_operand.vmem [shape: f32[32,256], index: 5, kind: input, shape index: {}]
  %s6 = inlined_call_operand.vmem [shape: f32[1,256], index: 6, kind: input, shape index: {}]
  %s7 = inlined_call_operand.vmem [shape: f32[48,16], index: 7, kind: input, shape index: {}]
  %s8 = inlined_call_operand.vmem [shape: f32[1,16], index: 8, kind: input, shape index: {}]
  %s9 = inlined_call_operand.vmem [shape: f32[16,16], index: 9, kind: input, shape index: {}]
  %s10 = inlined_call_operand.hbm [shape: f32[256,256], index: 10, kind: input, shape index: {}]
  %s11 = inlined_call_operand.vmem [shape: f32[48,16], index: 11, kind: input, shape index: {}]
  %s12 = inlined_call_operand.vmem [shape: f32[1,16], index: 12, kind: input, shape index: {}]
  %s13 = inlined_call_operand.vmem [shape: f32[256,128], index: 13, kind: input, shape index: {}]
  %s14 = inlined_call_operand.vmem [shape: f32[1,128], index: 14, kind: input, shape index: {}]
  %s15 = inlined_call_operand.vmem [shape: f32[16,256], index: 15, kind: input, shape index: {}]
  %s16 = inlined_call_operand.vmem [shape: f32[2,256], index: 16, kind: output, shape index: {0}]
  %s17 = inlined_call_operand.vmem [shape: f32[2,128], index: 17, kind: output, shape index: {1}]
  %18 = xla_tuple %s16, %s17
  %s19 = sld [smem:[#allocation0]]
  $region86: #{synthesis_foreword_forward.1} parent=0
    _
  %s21 = ssub.s32 1, %s19
  %s22 = scalar_select 0, %s21, %s19
  $region1: #{synthesis_foreword_forward.1} parent=0
    #allocation2 [shape = 'u8[262144]{0}', space=vmem, size = 0x40000, scoped, tag = 'input window, operand 10, single buffered']
    #allocation3 [shape = 's32[1]{0}', space=sflag, size = 0x4, scoped, tag = 'scoped memory for synthesis_foreword_forward.1']
    %23 = vsyncpa [#allocation3], 0
    // Predicated region
    $region2: #{synthesis_foreword_forward.1} parent=1 // pred_check
      _
    $region3: #{synthesis_foreword_forward.1} parent=1 // pred_check_branch
      %25 = sbr.rel (0) target = $region5
    $region4: #{synthesis_foreword_forward.1} parent=1 // pred_region
      _
    $region5: #{synthesis_foreword_forward.1} parent=1 // pred_fallthru
      _
    // Predicated region
    $region6: #{synthesis_foreword_forward.1} parent=1 // pred_check
      _
    $region7: #{synthesis_foreword_forward.1} parent=1 // pred_check_branch
      %27 = sbr.rel (0) target = $region9
    $region8: #{synthesis_foreword_forward.1} parent=1 // pred_region
      _
    $region9: #{synthesis_foreword_forward.1} parent=1 // pred_fallthru
      _
    // Predicated region
    $region10: #{synthesis_foreword_forward.1} parent=1 // pred_check
      _
    $region11: #{synthesis_foreword_forward.1} parent=1 // pred_check_branch
      %29 = sbr.rel (0) target = $region13
    $region12: #{synthesis_foreword_forward.1} parent=1 // pred_region
      _
    $region13: #{synthesis_foreword_forward.1} parent=1 // pred_fallthru
      _
    // Predicated region
    $region14: #{synthesis_foreword_forward.1} parent=1 // pred_check
      _
    $region15: #{synthesis_foreword_forward.1} parent=1 // pred_check_branch
      %31 = sbr.rel (0) target = $region17
    $region16: #{synthesis_foreword_forward.1} parent=1 // pred_region
      _
    $region17: #{synthesis_foreword_forward.1} parent=1 // pred_fallthru
      _
    // Predicated region
    $region18: #{synthesis_foreword_forward.1} parent=1 // pred_check
      _
    $region19: #{synthesis_foreword_forward.1} parent=1 // pred_check_branch
      %33 = sbr.rel (0) target = $region21
    $region20: #{synthesis_foreword_forward.1} parent=1 // pred_region
      _
    $region21: #{synthesis_foreword_forward.1} parent=1 // pred_fallthru
      _
    // Predicated region
    $region22: #{synthesis_foreword_forward.1} parent=1 // pred_check
      _
    $region23: #{synthesis_foreword_forward.1} parent=1 // pred_check_branch
      %35 = sbr.rel (0) target = $region25
    $region24: #{synthesis_foreword_forward.1} parent=1 // pred_region
      _
    $region25: #{synthesis_foreword_forward.1} parent=1 // pred_fallthru
      _
    // Predicated region
    $region26: #{synthesis_foreword_forward.1} parent=1 // pred_check
      _
    $region27: #{synthesis_foreword_forward.1} parent=1 // pred_check_branch
      %37 = sbr.rel (0) target = $region29
    $region28: #{synthesis_foreword_forward.1} parent=1 // pred_region
      _
    $region29: #{synthesis_foreword_forward.1} parent=1 // pred_fallthru
      _
    // Predicated region
    $region30: #{synthesis_foreword_forward.1} parent=1 // pred_check
      _
    $region31: #{synthesis_foreword_forward.1} parent=1 // pred_check_branch
      %39 = sbr.rel (0) target = $region33
    $region32: #{synthesis_foreword_forward.1} parent=1 // pred_region
      _
    $region33: #{synthesis_foreword_forward.1} parent=1 // pred_fallthru
      _
    // Predicated region
    $region34: #{synthesis_foreword_forward.1} parent=1 // pred_check
      _
    $region35: #{synthesis_foreword_forward.1} parent=1 // pred_check_branch
      %41 = sbr.rel (0) target = $region37
    $region36: #{synthesis_foreword_forward.1} parent=1 // pred_region
      _
    $region37: #{synthesis_foreword_forward.1} parent=1 // pred_fallthru
      _
    // Predicated region
    $region38: #{synthesis_foreword_forward.1} parent=1 // pred_check
      _
    $region39: #{synthesis_foreword_forward.1} parent=1 // pred_check_branch
      %43 = sbr.rel (0) target = $region41
    $region40: #{synthesis_foreword_forward.1} parent=1 // pred_region
      _
    $region41: #{synthesis_foreword_forward.1} parent=1 // pred_fallthru
      _
    // Predicated region
    $region42: #{synthesis_foreword_forward.1} parent=1 // pred_check
      _
    $region43: #{synthesis_foreword_forward.1} parent=1 // pred_check_branch
      %45 = sbr.rel (0) target = $region45
    $region44: #{synthesis_foreword_forward.1} parent=1 // pred_region
      %47 = vsyncadd [#allocation3], 0
      %s48 = sshll.u32 %s10, 4
      %s49 = int_to_ptr.hbm [resolvable:$true] %s48
      %s50 = sshll.u32 [#allocation2], 4
      %s51 = int_to_ptr.vmem [resolvable:$true] %s50
      %56 = dma.hbm_to_vmem [thread:$0]  %s49, 8192, %s51, [#allocation3], 256, 256, 16
    $region45: #{synthesis_foreword_forward.1} parent=1 // pred_fallthru
      _
    // Predicated region
    $region46: #{synthesis_foreword_forward.1} parent=1 // pred_check
      _
    $region47: #{synthesis_foreword_forward.1} parent=1 // pred_check_branch
      %58 = sbr.rel (0) target = $region49
    $region48: #{synthesis_foreword_forward.1} parent=1 // pred_region
      _
    $region49: #{synthesis_foreword_forward.1} parent=1 // pred_fallthru
      _
    // Predicated region
    $region50: #{synthesis_foreword_forward.1} parent=1 // pred_check
      _
    $region51: #{synthesis_foreword_forward.1} parent=1 // pred_check_branch
      %60 = sbr.rel (0) target = $region53
    $region52: #{synthesis_foreword_forward.1} parent=1 // pred_region
      _
    $region53: #{synthesis_foreword_forward.1} parent=1 // pred_fallthru
      _
    // Predicated region
    $region54: #{synthesis_foreword_forward.1} parent=1 // pred_check
      _
    $region55: #{synthesis_foreword_forward.1} parent=1 // pred_check_branch
      %62 = sbr.rel (0) target = $region57
    $region56: #{synthesis_foreword_forward.1} parent=1 // pred_region
      _
    $region57: #{synthesis_foreword_forward.1} parent=1 // pred_fallthru
      _
    // Predicated region
    $region58: #{synthesis_foreword_forward.1} parent=1 // pred_check
      _
    $region59: #{synthesis_foreword_forward.1} parent=1 // pred_check_branch
      %64 = sbr.rel (0) target = $region61
    $region60: #{synthesis_foreword_forward.1} parent=1 // pred_region
      _
    $region61: #{synthesis_foreword_forward.1} parent=1 // pred_fallthru
      _
    // Predicated region
    $region62: #{synthesis_foreword_forward.1} parent=1 // pred_check
      _
    $region63: #{synthesis_foreword_forward.1} parent=1 // pred_check_branch
      %66 = sbr.rel (0) target = $region65
    $region64: #{synthesis_foreword_forward.1} parent=1 // pred_region
      _
    $region65: #{synthesis_foreword_forward.1} parent=1 // pred_fallthru
      _
    // Predicated region
    $region66: #{synthesis_foreword_forward.1} parent=1 // pred_check
      _
    $region67: #{synthesis_foreword_forward.1} parent=1 // pred_check_branch
      %68 = sbr.rel (0) target = $region69
    $region68: #{synthesis_foreword_forward.1} parent=1 // pred_region
      %70 = dma.done [#allocation3], 8192
    $region69: #{synthesis_foreword_forward.1} parent=1 // pred_fallthru
      _
    %v71 = vld [vmem:[%s15] sm:$0xff]
    %v72 = vld [vmem:[%s15 + $0x8] sm:$0xff]
    %v73 = vld [vmem:[%s15 + $0x10] sm:$0xff]
    %v74 = vld [vmem:[%s15 + $0x18] sm:$0xff]
    %v75 = vld [vmem:[%s0] sm:$0x3]
    %v76 = vld [vmem:[%s5] sm:$0xff]
    %v77 = vld [vmem:[%s5 + $0x8] sm:$0xff]
    %v78 = vld [vmem:[%s5 + $0x10] sm:$0xff]
    %v79 = vld [vmem:[%s5 + $0x18] sm:$0xff]
    %v80 = vld [vmem:[%s5 + $0x20] sm:$0xff]
    %v81 = vld [vmem:[%s5 + $0x28] sm:$0xff]
    %v82 = vld [vmem:[%s5 + $0x30] sm:$0xff]
    %v83 = vld [vmem:[%s5 + $0x38] sm:$0xff]
    %v84 = vld [vmem:[%s6] sm:$0x3]
    %v86 = vperm.slane %v84, 0
    %v87 = vperm.slane %v84, 1
    %vm90 = vcmask 261120
    %v92 = vsel %vm90, %v75, 0
    %94 = vmatpush.msra.mxu0 0.0
    %95 = vmatpush.msra.mxu0 0.0
    %96 = vmatpush.msra.mxu0 0.0
    %97 = vmatpush.msra.mxu0 0.0
    %98 = vmatpush.msra.mxu0 0.0
    %99 = vmatpush.msra.mxu0 0.0
    %100 = vmatpush.msra.mxu0 0.0
    %101 = vmatpush.msra.mxu0 0.0
    %102 = vmatpush.msra.mxu0 0.0
    %103 = vmatpush.msra.mxu0 0.0
    %104 = vmatpush.msra.mxu0 0.0
    %105 = vmatpush.msra.mxu0 0.0
    %106 = vmatpush.msra.mxu0 %v82
    %107 = vmatpush.msra.mxu0 %v80
    %108 = vmatpush.msra.mxu0 %v78
    %109 = vmatpush.msra.mxu0 %v76
    %110 = vmatmul.f32.gmra.mxu0 %v92
    %v111 = vpop.f32.mrf.mxu0
    %v112 = vadd.f32 %v86, %v111
    %113 = vdwg.mxu0
    %114 = vmatpush.msra.mxu0 0.0
    %115 = vmatpush.msra.mxu0 0.0
    %116 = vmatpush.msra.mxu0 0.0
    %117 = vmatpush.msra.mxu0 0.0
    %118 = vmatpush.msra.mxu0 0.0
    %119 = vmatpush.msra.mxu0 0.0
    %120 = vmatpush.msra.mxu0 0.0
    %121 = vmatpush.msra.mxu0 0.0
    %122 = vmatpush.msra.mxu0 0.0
    %123 = vmatpush.msra.mxu0 0.0
    %124 = vmatpush.msra.mxu0 0.0
    %125 = vmatpush.msra.mxu0 0.0
    %126 = vmatpush.msra.mxu0 %v83
    %127 = vmatpush.msra.mxu0 %v81
    %128 = vmatpush.msra.mxu0 %v79
    %129 = vmatpush.msra.mxu0 %v77
    %130 = vmatmul.f32.gmra.mxu0 %v92
    %v131 = vpop.f32.mrf.mxu0
    %v132 = vadd.f32 %v87, %v131
    %133 = vdwg.mxu0
    %vm134 = vcmp.ge.f32.partialorder %v112, 0.0
    %vm135 = vcmp.ge.f32.partialorder %v132, 0.0
    %v136 = vmul.f32 %v112, 0.2
    %v137 = vmul.f32 %v132, 0.2
    %v138 = vsel %vm134, %v112, %v136
    %v139 = vsel %vm135, %v132, %v137
    %v140 = vmul.f32 %v138, 1.4142135
    %v141 = vmul.f32 %v139, 1.4142135
    %v142 = vld [vmem:[%s3] sm:$0xf]
    %144 = vst [vmem:[#allocation1] ss:$4 sm:$0xff] %v142
    %v145 = vld.sshfl [vmem:[#allocation1] sm:$0xff pattern:$0x73625140]
    %v146 = vld.sshfl [vmem:[#allocation1 + $0x8] sm:$0xff pattern:$0x73625140]
    %v149 = vadd.f32 %v140, %v145
    %v150 = vadd.f32 %v141, %v146
    %v151 = vld [vmem:[%s1] sm:$0x3]
    %v152 = vld [vmem:[%s7] sm:$0xff]
    %v153 = vld [vmem:[%s7 + $0x8] sm:$0xff]
    %v154 = vld [vmem:[%s7 + $0x10] sm:$0xff]
    %v155 = vld [vmem:[%s7 + $0x18] sm:$0xff]
    %v156 = vld [vmem:[%s7 + $0x20] sm:$0xff]
    %v157 = vld [vmem:[%s7 + $0x28] sm:$0xff]
    %v158 = vld [vmem:[%s8] sm:$0x1]
    %v160 = vperm.slane %v158, 0
    %vm162 = vcmask 392192
    %v164 = vsel %vm162, %v151, 0
    %166 = vmatpush.msra.mxu0 0.0
    %167 = vmatpush.msra.mxu0 0.0
    %168 = vmatpush.msra.mxu0 0.0
    %169 = vmatpush.msra.mxu0 0.0
    %170 = vmatpush.msra.mxu0 0.0
    %171 = vmatpush.msra.mxu0 0.0
    %172 = vmatpush.msra.mxu0 0.0
    %173 = vmatpush.msra.mxu0 0.0
    %174 = vmatpush.msra.mxu0 0.0
    %175 = vmatpush.msra.mxu0 0.0
    %176 = vmatpush.msra.mxu0 %v157
    %177 = vmatpush.msra.mxu0 %v156
    %178 = vmatpush.msra.mxu0 %v155
    %179 = vmatpush.msra.mxu0 %v154
    %180 = vmatpush.msra.mxu0 %v153
    %181 = vmatpush.msra.mxu0 %v152
    %182 = vmatmul.f32.gmra.mxu0 %v164
    %v183 = vpop.f32.mrf.mxu0
    %v184 = vadd.f32 %v160, %v183
    %185 = vdwg.mxu0
    %v186 = vmul.f32 %v184, %v184
    %v187 = vld [vmem:[%s9] sm:$0xff]
    %v188 = vld [vmem:[%s9 + $0x8] sm:$0xff]
    %vm189 = vcmask 130048
    %v191 = vsel %vm189, %v186, 0
    %193 = vmatpush.msra.mxu0 0.0
    %194 = vmatpush.msra.mxu0 0.0
    %195 = vmatpush.msra.mxu0 0.0
    %196 = vmatpush.msra.mxu0 0.0
    %197 = vmatpush.msra.mxu0 0.0
    %198 = vmatpush.msra.mxu0 0.0
    %199 = vmatpush.msra.mxu0 0.0
    %200 = vmatpush.msra.mxu0 0.0
    %201 = vmatpush.msra.mxu0 0.0
    %202 = vmatpush.msra.mxu0 0.0
    %203 = vmatpush.msra.mxu0 0.0
    %204 = vmatpush.msra.mxu0 0.0
    %205 = vmatpush.msra.mxu0 0.0
    %206 = vmatpush.msra.mxu0 0.0
    %207 = vmatpush.msra.mxu0 %v188
    %208 = vmatpush.msra.mxu0 %v187
    %209 = vmatmul.f32.gmra.mxu0 %v191
    %v210 = vpop.f32.mrf.mxu0
    %v211 = vadd.f32 1e-08, %v210
    %212 = vdwg.mxu0
    %v213 = vrsqrt.pop %v211
    %v214 = vmul.f32 %v213, %v211
    %v215 = vmul.f32 %v214, %v213
    %v216 = vmul.f32 0.5, %v215
    %v217 = vsub.f32 1.5, %v216
    %v218 = vmul.f32 %v213, %v217
    %vm219 = vweird.f32 %v211
    %vm220 = vweird.f32 %v213
    %vm221 = vmor %vm219, %vm220
    %v222 = vsel %vm221, %v213, %v218
    %v224 = vsel %vm189, %v184, 0
    %226 = vmatpush.msra.mxu0 0.0
    %227 = vmatpush.msra.mxu0 0.0
    %228 = vmatpush.msra.mxu0 0.0
    %229 = vmatpush.msra.mxu0 0.0
    %230 = vmatpush.msra.mxu0 0.0
    %231 = vmatpush.msra.mxu0 0.0
    %232 = vmatpush.msra.mxu0 0.0
    %233 = vmatpush.msra.mxu0 0.0
    %234 = vmatpush.msra.mxu0 0.0
    %235 = vmatpush.msra.mxu0 0.0
    %236 = vmatpush.msra.mxu0 0.0
    %237 = vmatpush.msra.mxu0 0.0
    %238 = vmatpush.msra.mxu0 0.0
    %239 = vmatpush.msra.mxu0 0.0
    %240 = vmatpush.msra.mxu0 %v73
    %241 = vmatpush.msra.mxu0 %v71
    %242 = vmatmul.f32.gmra.mxu0 %v224
    %v243 = vpop.f32.mrf.mxu0
    %v244 = vadd.f32 0.0, %v243
    %245 = vdwg.mxu0
    %246 = vmatpush.msra.mxu0 0.0
    %247 = vmatpush.msra.mxu0 0.0
    %248 = vmatpush.msra.mxu0 0.0
    %249 = vmatpush.msra.mxu0 0.0
    %250 = vmatpush.msra.mxu0 0.0
    %251 = vmatpush.msra.mxu0 0.0
    %252 = vmatpush.msra.mxu0 0.0
    %253 = vmatpush.msra.mxu0 0.0
    %254 = vmatpush.msra.mxu0 0.0
    %255 = vmatpush.msra.mxu0 0.0
    %256 = vmatpush.msra.mxu0 0.0
    %257 = vmatpush.msra.mxu0 0.0
    %258 = vmatpush.msra.mxu0 0.0
    %259 = vmatpush.msra.mxu0 0.0
    %260 = vmatpush.msra.mxu0 %v74
    %261 = vmatpush.msra.mxu0 %v72
    %262 = vmatmul.f32.gmra.mxu0 %v224
    %v263 = vpop.f32.mrf.mxu0
    %v264 = vadd.f32 0.0, %v263
    %265 = vdwg.mxu0
    %v266 = vmul.f32 %v149, %v244
    %v267 = vmul.f32 %v150, %v264
    %v268 = vld [vmem:[#allocation2] sm:$0xff]
    %v269 = vld [vmem:[#allocation2 + $0x8] sm:$0xff]
    %v270 = vld [vmem:[#allocation2 + $0x10] sm:$0xff]
    %v271 = vld [vmem:[#allocation2 + $0x18] sm:$0xff]
    %v272 = vld [vmem:[#allocation2 + $0x20] sm:$0xff]
    %v273 = vld [vmem:[#allocation2 + $0x28] sm:$0xff]
    %v274 = vld [vmem:[#allocation2 + $0x30] sm:$0xff]
    %v275 = vld [vmem:[#allocation2 + $0x38] sm:$0xff]
    %v276 = vld [vmem:[#allocation2 + $0x40] sm:$0xff]
    %v277 = vld [vmem:[#allocation2 + $0x48] sm:$0xff]
    %v278 = vld [vmem:[#allocation2 + $0x50] sm:$0xff]
    %v279 = vld [vmem:[#allocation2 + $0x58] sm:$0xff]
    %v280 = vld [vmem:[#allocation2 + $0x60] sm:$0xff]
    %v281 = vld [vmem:[#allocation2 + $0x68] sm:$0xff]
    %v282 = vld [vmem:[#allocation2 + $0x70] sm:$0xff]
    %v283 = vld [vmem:[#allocation2 + $0x78] sm:$0xff]
    %v284 = vld [vmem:[#allocation2 + $0x80] sm:$0xff]
    %v285 = vld [vmem:[#allocation2 + $0x88] sm:$0xff]
    %v286 = vld [vmem:[#allocation2 + $0x90] sm:$0xff]
    %v287 = vld [vmem:[#allocation2 + $0x98] sm:$0xff]
    %v288 = vld [vmem:[#allocation2 + $0xa0] sm:$0xff]
    %v289 = vld [vmem:[#allocation2 + $0xa8] sm:$0xff]
    %v290 = vld [vmem:[#allocation2 + $0xb0] sm:$0xff]
    %v291 = vld [vmem:[#allocation2 + $0xb8] sm:$0xff]
    %v292 = vld [vmem:[#allocation2 + $0xc0] sm:$0xff]
    %v293 = vld [vmem:[#allocation2 + $0xc8] sm:$0xff]
    %v294 = vld [vmem:[#allocation2 + $0xd0] sm:$0xff]
    %v295 = vld [vmem:[#allocation2 + $0xd8] sm:$0xff]
    %v296 = vld [vmem:[#allocation2 + $0xe0] sm:$0xff]
    %v297 = vld [vmem:[#allocation2 + $0xe8] sm:$0xff]
    %v298 = vld [vmem:[#allocation2 + $0xf0] sm:$0xff]
    %v299 = vld [vmem:[#allocation2 + $0xf8] sm:$0xff]
    %v300 = vld [vmem:[#allocation2 + $0x100] sm:$0xff]
    %v301 = vld [vmem:[#allocation2 + $0x108] sm:$0xff]
    %v302 = vld [vmem:[#allocation2 + $0x110] sm:$0xff]
    %v303 = vld [vmem:[#allocation2 + $0x118] sm:$0xff]
    %v304 = vld [vmem:[#allocation2 + $0x120] sm:$0xff]
    %v305 = vld [vmem:[#allocation2 + $0x128] sm:$0xff]
    %v306 = vld [vmem:[#allocation2 + $0x130] sm:$0xff]
    %v307 = vld [vmem:[#allocation2 + $0x138] sm:$0xff]
    %v308 = vld [vmem:[#allocation2 + $0x140] sm:$0xff]
    %v309 = vld [vmem:[#allocation2 + $0x148] sm:$0xff]
    %v310 = vld [vmem:[#allocation2 + $0x150] sm:$0xff]
    %v311 = vld [vmem:[#allocation2 + $0x158] sm:$0xff]
    %v312 = vld [vmem:[#allocation2 + $0x160] sm:$0xff]
    %v313 = vld [vmem:[#allocation2 + $0x168] sm:$0xff]
    %v314 = vld [vmem:[#allocation2 + $0x170] sm:$0xff]
    %v315 = vld [vmem:[#allocation2 + $0x178] sm:$0xff]
    %v316 = vld [vmem:[#allocation2 + $0x180] sm:$0xff]
    %v317 = vld [vmem:[#allocation2 + $0x188] sm:$0xff]
    %v318 = vld [vmem:[#allocation2 + $0x190] sm:$0xff]
    %v319 = vld [vmem:[#allocation2 + $0x198] sm:$0xff]
    %v320 = vld [vmem:[#allocation2 + $0x1a0] sm:$0xff]
    %v321 = vld [vmem:[#allocation2 + $0x1a8] sm:$0xff]
    %v322 = vld [vmem:[#allocation2 + $0x1b0] sm:$0xff]
    %v323 = vld [vmem:[#allocation2 + $0x1b8] sm:$0xff]
    %v324 = vld [vmem:[#allocation2 + $0x1c0] sm:$0xff]
    %v325 = vld [vmem:[#allocation2 + $0x1c8] sm:$0xff]
    %v326 = vld [vmem:[#allocation2 + $0x1d0] sm:$0xff]
    %v327 = vld [vmem:[#allocation2 + $0x1d8] sm:$0xff]
    %v328 = vld [vmem:[#allocation2 + $0x1e0] sm:$0xff]
    %v329 = vld [vmem:[#allocation2 + $0x1e8] sm:$0xff]
    %v330 = vld [vmem:[#allocation2 + $0x1f0] sm:$0xff]
    %v331 = vld [vmem:[#allocation2 + $0x1f8] sm:$0xff]
    %332 = vmatpush.msra.mxu0 %v298
    %333 = vmatpush.msra.mxu0 %v296
    %334 = vmatpush.msra.mxu0 %v294
    %335 = vmatpush.msra.mxu0 %v292
    %336 = vmatpush.msra.mxu0 %v290
    %337 = vmatpush.msra.mxu0 %v288
    %338 = vmatpush.msra.mxu0 %v286
    %339 = vmatpush.msra.mxu0 %v284
    %340 = vmatpush.msra.mxu0 %v282
    %341 = vmatpush.msra.mxu0 %v280
    %342 = vmatpush.msra.mxu0 %v278
    %343 = vmatpush.msra.mxu0 %v276
    %344 = vmatpush.msra.mxu0 %v274
    %345 = vmatpush.msra.mxu0 %v272
    %346 = vmatpush.msra.mxu0 %v270
    %347 = vmatpush.msra.mxu0 %v268
    %348 = vmatmul.f32.gmra.mxu0 %v266
    %v349 = vpop.f32.mrf.mxu0
    %v350 = vadd.f32 0.0, %v349
    %351 = vdwg.mxu0
    %352 = vmatpush.msra.mxu0 %v330
    %353 = vmatpush.msra.mxu0 %v328
    %354 = vmatpush.msra.mxu0 %v326
    %355 = vmatpush.msra.mxu0 %v324
    %356 = vmatpush.msra.mxu0 %v322
    %357 = vmatpush.msra.mxu0 %v320
    %358 = vmatpush.msra.mxu0 %v318
    %359 = vmatpush.msra.mxu0 %v316
    %360 = vmatpush.msra.mxu0 %v314
    %361 = vmatpush.msra.mxu0 %v312
    %362 = vmatpush.msra.mxu0 %v310
    %363 = vmatpush.msra.mxu0 %v308
    %364 = vmatpush.msra.mxu0 %v306
    %365 = vmatpush.msra.mxu0 %v304
    %366 = vmatpush.msra.mxu0 %v302
    %367 = vmatpush.msra.mxu0 %v300
    %368 = vmatmul.f32.gmra.mxu0 %v267
    %v369 = vpop.f32.mrf.mxu0
    %v370 = vadd.f32 %v350, %v369
    %371 = vdwg.mxu0
    %372 = vmatpush.msra.mxu0 %v299
    %373 = vmatpush.msra.mxu0 %v297
    %374 = vmatpush.msra.mxu0 %v295
    %375 = vmatpush.msra.mxu0 %v293
    %376 = vmatpush.msra.mxu0 %v291
    %377 = vmatpush.msra.mxu0 %v289
    %378 = vmatpush.msra.mxu0 %v287
    %379 = vmatpush.msra.mxu0 %v285
    %380 = vmatpush.msra.mxu0 %v283
    %381 = vmatpush.msra.mxu0 %v281
    %382 = vmatpush.msra.mxu0 %v279
    %383 = vmatpush.msra.mxu0 %v277
    %384 = vmatpush.msra.mxu0 %v275
    %385 = vmatpush.msra.mxu0 %v273
    %386 = vmatpush.msra.mxu0 %v271
    %387 = vmatpush.msra.mxu0 %v269
    %388 = vmatmul.f32.gmra.mxu0 %v266
    %v389 = vpop.f32.mrf.mxu0
    %v390 = vadd.f32 0.0, %v389
    %391 = vdwg.mxu0
    %392 = vmatpush.msra.mxu0 %v331
    %393 = vmatpush.msra.mxu0 %v329
    %394 = vmatpush.msra.mxu0 %v327
    %395 = vmatpush.msra.mxu0 %v325
    %396 = vmatpush.msra.mxu0 %v323
    %397 = vmatpush.msra.mxu0 %v321
    %398 = vmatpush.msra.mxu0 %v319
    %399 = vmatpush.msra.mxu0 %v317
    %400 = vmatpush.msra.mxu0 %v315
    %401 = vmatpush.msra.mxu0 %v313
    %402 = vmatpush.msra.mxu0 %v311
    %403 = vmatpush.msra.mxu0 %v309
    %404 = vmatpush.msra.mxu0 %v307
    %405 = vmatpush.msra.mxu0 %v305
    %406 = vmatpush.msra.mxu0 %v303
    %407 = vmatpush.msra.mxu0 %v301
    %408 = vmatmul.f32.gmra.mxu0 %v267
    %v409 = vpop.f32.mrf.mxu0
    %v410 = vadd.f32 %v390, %v409
    %411 = vdwg.mxu0
    %v413 = vsel %vm189, %v222, 0
    %415 = vmatpush.msra.mxu0 0.0
    %416 = vmatpush.msra.mxu0 0.0
    %417 = vmatpush.msra.mxu0 0.0
    %418 = vmatpush.msra.mxu0 0.0
    %419 = vmatpush.msra.mxu0 0.0
    %420 = vmatpush.msra.mxu0 0.0
    %421 = vmatpush.msra.mxu0 0.0
    %422 = vmatpush.msra.mxu0 0.0
    %423 = vmatpush.msra.mxu0 0.0
    %424 = vmatpush.msra.mxu0 0.0
    %425 = vmatpush.msra.mxu0 0.0
    %426 = vmatpush.msra.mxu0 0.0
    %427 = vmatpush.msra.mxu0 0.0
    %428 = vmatpush.msra.mxu0 0.0
    %429 = vmatpush.msra.mxu0 %v73
    %430 = vmatpush.msra.mxu0 %v71
    %431 = vmatmul.f32.gmra.mxu0 %v413
    %v432 = vpop.f32.mrf.mxu0
    %v433 = vadd.f32 0.0, %v432
    %434 = vdwg.mxu0
    %435 = vmatpush.msra.mxu0 0.0
    %436 = vmatpush.msra.mxu0 0.0
    %437 = vmatpush.msra.mxu0 0.0
    %438 = vmatpush.msra.mxu0 0.0
    %439 = vmatpush.msra.mxu0 0.0
    %440 = vmatpush.msra.mxu0 0.0
    %441 = vmatpush.msra.mxu0 0.0
    %442 = vmatpush.msra.mxu0 0.0
    %443 = vmatpush.msra.mxu0 0.0
    %444 = vmatpush.msra.mxu0 0.0
    %445 = vmatpush.msra.mxu0 0.0
    %446 = vmatpush.msra.mxu0 0.0
    %447 = vmatpush.msra.mxu0 0.0
    %448 = vmatpush.msra.mxu0 0.0
    %449 = vmatpush.msra.mxu0 %v74
    %450 = vmatpush.msra.mxu0 %v72
    %451 = vmatmul.f32.gmra.mxu0 %v413
    %v452 = vpop.f32.mrf.mxu0
    %v453 = vadd.f32 0.0, %v452
    %454 = vdwg.mxu0
    %v455 = vmul.f32 %v370, %v433
    %v456 = vmul.f32 %v410, %v453
    %v457 = vld [vmem:[%s4] sm:$0xf]
    %459 = vst [vmem:[#allocation1] ss:$4 sm:$0xff] %v457
    %v460 = vld.sshfl [vmem:[#allocation1] sm:$0xff pattern:$0x73625140]
    %v461 = vld.sshfl [vmem:[#allocation1 + $0x8] sm:$0xff pattern:$0x73625140]
    %v464 = vadd.f32 %v455, %v460
    %v465 = vadd.f32 %v456, %v461
    %vm466 = vcmp.ge.f32.partialorder %v464, 0.0
    %vm467 = vcmp.ge.f32.partialorder %v465, 0.0
    %v468 = vmul.f32 %v464, 0.2
    %v469 = vmul.f32 %v465, 0.2
    %v470 = vsel %vm466, %v464, %v468
    %v471 = vsel %vm467, %v465, %v469
    %v472 = vmul.f32 %v470, 1.4142135
    %v473 = vmul.f32 %v471, 1.4142135
    %v476 = vrot.slane %v473, 6
    %vm477 = vcmask 1041408
    %v478 = vsel %vm477, %v472, %v476
    %480 = vst [vmem:[%s16] sm:$0xf] %v478
    %v481 = vld [vmem:[%s2] sm:$0x3]
    %v482 = vld [vmem:[%s11] sm:$0xff]
    %v483 = vld [vmem:[%s11 + $0x8] sm:$0xff]
    %v484 = vld [vmem:[%s11 + $0x10] sm:$0xff]
    %v485 = vld [vmem:[%s11 + $0x18] sm:$0xff]
    %v486 = vld [vmem:[%s11 + $0x20] sm:$0xff]
    %v487 = vld [vmem:[%s11 + $0x28] sm:$0xff]
    %v488 = vld [vmem:[%s12] sm:$0x1]
    %v490 = vperm.slane %v488, 0
    %v493 = vsel %vm162, %v481, 0
    %495 = vmatpush.msra.mxu0 0.0
    %496 = vmatpush.msra.mxu0 0.0
    %497 = vmatpush.msra.mxu0 0.0
    %498 = vmatpush.msra.mxu0 0.0
    %499 = vmatpush.msra.mxu0 0.0
    %500 = vmatpush.msra.mxu0 0.0
    %501 = vmatpush.msra.mxu0 0.0
    %502 = vmatpush.msra.mxu0 0.0
    %503 = vmatpush.msra.mxu0 0.0
    %504 = vmatpush.msra.mxu0 0.0
    %505 = vmatpush.msra.mxu0 %v487
    %506 = vmatpush.msra.mxu0 %v486
    %507 = vmatpush.msra.mxu0 %v485
    %508 = vmatpush.msra.mxu0 %v484
    %509 = vmatpush.msra.mxu0 %v483
    %510 = vmatpush.msra.mxu0 %v482
    %511 = vmatmul.f32.gmra.mxu0 %v493
    %v512 = vpop.f32.mrf.mxu0
    %v513 = vadd.f32 %v490, %v512
    %514 = vdwg.mxu0
    %v516 = vsel %vm189, %v513, 0
    %518 = vmatpush.msra.mxu0 0.0
    %519 = vmatpush.msra.mxu0 0.0
    %520 = vmatpush.msra.mxu0 0.0
    %521 = vmatpush.msra.mxu0 0.0
    %522 = vmatpush.msra.mxu0 0.0
    %523 = vmatpush.msra.mxu0 0.0
    %524 = vmatpush.msra.mxu0 0.0
    %525 = vmatpush.msra.mxu0 0.0
    %526 = vmatpush.msra.mxu0 0.0
    %527 = vmatpush.msra.mxu0 0.0
    %528 = vmatpush.msra.mxu0 0.0
    %529 = vmatpush.msra.mxu0 0.0
    %530 = vmatpush.msra.mxu0 0.0
    %531 = vmatpush.msra.mxu0 0.0
    %532 = vmatpush.msra.mxu0 %v73
    %533 = vmatpush.msra.mxu0 %v71
    %534 = vmatmul.f32.gmra.mxu0 %v516
    %v535 = vpop.f32.mrf.mxu0
    %v536 = vadd.f32 0.0, %v535
    %537 = vdwg.mxu0
    %538 = vmatpush.msra.mxu0 0.0
    %539 = vmatpush.msra.mxu0 0.0
    %540 = vmatpush.msra.mxu0 0.0
    %541 = vmatpush.msra.mxu0 0.0
    %542 = vmatpush.msra.mxu0 0.0
    %543 = vmatpush.msra.mxu0 0.0
    %544 = vmatpush.msra.mxu0 0.0
    %545 = vmatpush.msra.mxu0 0.0
    %546 = vmatpush.msra.mxu0 0.0
    %547 = vmatpush.msra.mxu0 0.0
    %548 = vmatpush.msra.mxu0 0.0
    %549 = vmatpush.msra.mxu0 0.0
    %550 = vmatpush.msra.mxu0 0.0
    %551 = vmatpush.msra.mxu0 0.0
    %552 = vmatpush.msra.mxu0 %v74
    %553 = vmatpush.msra.mxu0 %v72
    %554 = vmatmul.f32.gmra.mxu0 %v516
    %v555 = vpop.f32.mrf.mxu0
    %v556 = vadd.f32 0.0, %v555
    %557 = vdwg.mxu0
    %v558 = vmul.f32 %v472, %v536
    %v559 = vmul.f32 %v473, %v556
    %v560 = vld [vmem:[%s13] sm:$0xff]
    %v561 = vld [vmem:[%s13 + $0x8] sm:$0xff]
    %v562 = vld [vmem:[%s13 + $0x10] sm:$0xff]
    %v563 = vld [vmem:[%s13 + $0x18] sm:$0xff]
    %v564 = vld [vmem:[%s13 + $0x20] sm:$0xff]
    %v565 = vld [vmem:[%s13 + $0x28] sm:$0xff]
    %v566 = vld [vmem:[%s13 + $0x30] sm:$0xff]
    %v567 = vld [vmem:[%s13 + $0x38] sm:$0xff]
    %v568 = vld [vmem:[%s13 + $0x40] sm:$0xff]
    %v569 = vld [vmem:[%s13 + $0x48] sm:$0xff]
    %v570 = vld [vmem:[%s13 + $0x50] sm:$0xff]
    %v571 = vld [vmem:[%s13 + $0x58] sm:$0xff]
    %v572 = vld [vmem:[%s13 + $0x60] sm:$0xff]
    %v573 = vld [vmem:[%s13 + $0x68] sm:$0xff]
    %v574 = vld [vmem:[%s13 + $0x70] sm:$0xff]
    %v575 = vld [vmem:[%s13 + $0x78] sm:$0xff]
    %v576 = vld [vmem:[%s13 + $0x80] sm:$0xff]
    %v577 = vld [vmem:[%s13 + $0x88] sm:$0xff]
    %v578 = vld [vmem:[%s13 + $0x90] sm:$0xff]
    %v579 = vld [vmem:[%s13 + $0x98] sm:$0xff]
    %v580 = vld [vmem:[%s13 + $0xa0] sm:$0xff]
    %v581 = vld [vmem:[%s13 + $0xa8] sm:$0xff]
    %v582 = vld [vmem:[%s13 + $0xb0] sm:$0xff]
    %v583 = vld [vmem:[%s13 + $0xb8] sm:$0xff]
    %v584 = vld [vmem:[%s13 + $0xc0] sm:$0xff]
    %v585 = vld [vmem:[%s13 + $0xc8] sm:$0xff]
    %v586 = vld [vmem:[%s13 + $0xd0] sm:$0xff]
    %v587 = vld [vmem:[%s13 + $0xd8] sm:$0xff]
    %v588 = vld [vmem:[%s13 + $0xe0] sm:$0xff]
    %v589 = vld [vmem:[%s13 + $0xe8] sm:$0xff]
    %v590 = vld [vmem:[%s13 + $0xf0] sm:$0xff]
    %v591 = vld [vmem:[%s13 + $0xf8] sm:$0xff]
    %v592 = vld [vmem:[%s14] sm:$0x1]
    %v594 = vperm.slane %v592, 0
    %596 = vmatpush.msra.mxu0 %v575
    %597 = vmatpush.msra.mxu0 %v574
    %598 = vmatpush.msra.mxu0 %v573
    %599 = vmatpush.msra.mxu0 %v572
    %600 = vmatpush.msra.mxu0 %v571
    %601 = vmatpush.msra.mxu0 %v570
    %602 = vmatpush.msra.mxu0 %v569
    %603 = vmatpush.msra.mxu0 %v568
    %604 = vmatpush.msra.mxu0 %v567
    %605 = vmatpush.msra.mxu0 %v566
    %606 = vmatpush.msra.mxu0 %v565
    %607 = vmatpush.msra.mxu0 %v564
    %608 = vmatpush.msra.mxu0 %v563
    %609 = vmatpush.msra.mxu0 %v562
    %610 = vmatpush.msra.mxu0 %v561
    %611 = vmatpush.msra.mxu0 %v560
    %612 = vmatmul.f32.gmra.mxu0 %v558
    %v613 = vpop.f32.mrf.mxu0
    %v614 = vadd.f32 %v594, %v613
    %615 = vdwg.mxu0
    %616 = vmatpush.msra.mxu0 %v591
    %617 = vmatpush.msra.mxu0 %v590
    %618 = vmatpush.msra.mxu0 %v589
    %619 = vmatpush.msra.mxu0 %v588
    %620 = vmatpush.msra.mxu0 %v587
    %621 = vmatpush.msra.mxu0 %v586
    %622 = vmatpush.msra.mxu0 %v585
    %623 = vmatpush.msra.mxu0 %v584
    %624 = vmatpush.msra.mxu0 %v583
    %625 = vmatpush.msra.mxu0 %v582
    %626 = vmatpush.msra.mxu0 %v581
    %627 = vmatpush.msra.mxu0 %v580
    %628 = vmatpush.msra.mxu0 %v579
    %629 = vmatpush.msra.mxu0 %v578
    %630 = vmatpush.msra.mxu0 %v577
    %631 = vmatpush.msra.mxu0 %v576
    %632 = vmatmul.f32.gmra.mxu0 %v559
    %v633 = vpop.f32.mrf.mxu0
    %v634 = vadd.f32 %v614, %v633
    %635 = vdwg.mxu0
    %636 = vst [vmem:[%s17] sm:$0x3] %v634
    // Predicated region
    $region70: #{synthesis_foreword_forward.1} parent=1 // pred_check
      _
    $region71: #{synthesis_foreword_forward.1} parent=1 // pred_check_branch
      %638 = sbr.rel (0) target = $region73
    $region72: #{synthesis_foreword_forward.1} parent=1 // pred_region
      _
    $region73: #{synthesis_foreword_forward.1} parent=1 // pred_fallthru
      _
    // Predicated region
    $region74: #{synthesis_foreword_forward.1} parent=1 // pred_check
      _
    $region75: #{synthesis_foreword_forward.1} parent=1 // pred_check_branch
      %640 = sbr.rel (0) target = $region77
    $region76: #{synthesis_foreword_forward.1} parent=1 // pred_region
      _
    $region77: #{synthesis_foreword_forward.1} parent=1 // pred_fallthru
      _
    // Predicated region
    $region78: #{synthesis_foreword_forward.1} parent=1 // pred_check
      _
    $region79: #{synthesis_foreword_forward.1} parent=1 // pred_check_branch
      %642 = sbr.rel (0) target = $region81
    $region80: #{synthesis_foreword_forward.1} parent=1 // pred_region
      _
    $region81: #{synthesis_foreword_forward.1} parent=1 // pred_fallthru
      _
    // Predicated region
    $region82: #{synthesis_foreword_forward.1} parent=1 // pred_check
      _
    $region83: #{synthesis_foreword_forward.1} parent=1 // pred_check_branch
      %644 = sbr.rel (0) target = $region85
    $region84: #{synthesis_foreword_forward.1} parent=1 // pred_region
      _
    $region85: #{synthesis_foreword_forward.1} parent=1 // pred_fallthru
      _
    %645 = vsyncpa [#allocation3], 1

</llo_original>
